<compile_context>
chip_gen: v6e
topology: v6e:2x2x1
jax: 0.10.0
libtpu: 0.0.40
codegen_flags: <defaults>
</compile_context>

<pallas_src>
import functools

import jax
import jax.numpy as jnp
import numpy as np
from jax import lax
from jax.experimental import pallas as pl
from jax.experimental.pallas import tpu as pltpu


def _round_up(x, m):
    return (x + m - 1) // m * m


# ------------------------------ linear kernel -------------------------------

def _linear_kernel(x_ref, w_ref, b_ref, o_ref):
    """One row tile of y = x @ w + b (MXU matmul, f32 accumulation)."""
    y = jnp.dot(x_ref[...], w_ref[...], preferred_element_type=jnp.float32)
    o_ref[...] = (y + b_ref[...].astype(jnp.float32)).astype(o_ref.dtype)


def _linear(x, w, b, *, block_m=512):
    """y = x @ w + b with a row-tiled, pipelined Pallas matmul.

    x: [M, K]   w: [K, N] ([in, out] layout)   b: [N]   ->   [M, N]
    Output lane dim padded to a multiple of 128 (lane-dense stores), row dim
    padded to the tile; both pads are sliced off, so semantics are exact.
    """
    M, K = x.shape
    Kw, N = w.shape
    assert K == Kw, (K, Kw)

    n_pad = _round_up(N, 128)
    if n_pad != N:
        w = jnp.pad(w, ((0, 0), (0, n_pad - N)))
        b = jnp.pad(b, (0, n_pad - N))

    tm = min(block_m, _round_up(M, 8))
    m_pad = _round_up(M, tm)
    if m_pad != M:
        x = jnp.pad(x, ((0, m_pad - M), (0, 0)))

    b2 = b.reshape(1, n_pad)
    grid = (m_pad // tm,)
    isz = x.dtype.itemsize

    cost = pl.CostEstimate(
        flops=2 * m_pad * K * n_pad,
        transcendentals=0,
        bytes_accessed=isz * (m_pad * K + K * n_pad + n_pad + m_pad * n_pad),
    )
    # Double-buffered x / out tiles + single-buffered resident weight & bias.
    need = isz * (2 * tm * K + K * n_pad + n_pad + 2 * tm * n_pad)
    vmem_limit = int(min(max(2 * need, 16 << 20), 64 << 20))

    out = pl.pallas_call(
        _linear_kernel,
        grid=grid,
        in_specs=[
            pl.BlockSpec((tm, K), lambda i: (i, 0)),                  # row tile
            pl.BlockSpec((K, n_pad), lambda i: (0, 0),                # weights:
                         pipeline_mode=pl.Buffered(1)),               # resident, single-buffered
            pl.BlockSpec((1, n_pad), lambda i: (0, 0),                # bias: resident
                         pipeline_mode=pl.Buffered(1)),
        ],
        out_specs=pl.BlockSpec((tm, n_pad), lambda i: (i, 0)),
        out_shape=jax.ShapeDtypeStruct((m_pad, n_pad), x.dtype),
        compiler_params=pltpu.CompilerParams(
            dimension_semantics=("parallel",),
            vmem_limit_bytes=vmem_limit,
        ),
        cost_estimate=cost,
    )(x, w, b2)
    return out[:M, :N]


# ----------------------------- attention kernel ------------------------------

def _attn_kernel(qkv_ref, o_ref, *, num_heads, head_dim, scale):
    """Fused multi-head attention for one batch element.

    qkv_ref: [N, 3C] (QKV projection, heads laid out along lanes as
             [q_h0 .. q_h{H-1} | k_h0 .. | v_h0 ..]).
    o_ref:   [N, C]  heads merged along lanes -> lane-dense HBM writeback.
    Nothing N x N ever touches HBM.
    """
    C = num_heads * head_dim
    for h in range(num_heads):
        q0 = h * head_dim
        k0 = C + h * head_dim
        v0 = 2 * C + h * head_dim
        # Fold the softmax scale into q: N*hd multiplies instead of N*N.
        q = qkv_ref[:, q0:q0 + head_dim] * scale
        k = qkv_ref[:, k0:k0 + head_dim]
        v = qkv_ref[:, v0:v0 + head_dim]

        # s = q @ k^T  (f32 accumulation on the MXU).
        s = lax.dot_general(q, k, (((1,), (1,)), ((), ())),
                            preferred_element_type=jnp.float32)        # [N, N]
        m = jnp.max(s, axis=-1, keepdims=True)
        p = jnp.exp(s - m)                                             # f32
        l = jnp.sum(p, axis=-1, keepdims=True)
        # Deferred normalization: divide once per row after P @ V.
        o = jnp.dot(p.astype(v.dtype), v,
                    preferred_element_type=jnp.float32)                # [N, hd]
        o = o * pl.reciprocal(l)
        # Heads merged in VMEM; the per-tile HBM store is the full C-wide slab.
        o_ref[:, q0:q0 + head_dim] = o.astype(o_ref.dtype)
    # TODO(synk): attn_drop is identity (p=0.0 / eval); real dropout would use
    # pltpu.prng_seed + pltpu.stateful_bernoulli.


def _attention_core(qkv, num_heads, head_dim, scale):
    """qkv: [B, N, 3C]  ->  [B, N, C] with heads already merged."""
    B, N, threeC = qkv.shape
    C = num_heads * head_dim
    assert threeC == 3 * C, (threeC, C)

    isz = qkv.dtype.itemsize
    cost = pl.CostEstimate(
        flops=4 * B * num_heads * N * N * head_dim,
        transcendentals=B * num_heads * N * N,                       # exp
        bytes_accessed=isz * (B * N * 3 * C + B * N * C),
    )
    # Double-buffered qkv / o blocks + f32 score matrix + f32 per-head output.
    need = isz * 2 * (N * 3 * C + N * C) + 4 * N * N + 4 * N * head_dim
    vmem_limit = int(min(max(2 * need, 16 << 20), 64 << 20))

    # TODO(synk): for large-N VOLO stages, add a KV-tile grid axis with online
    # softmax (flash style) so VMEM scales with N*tk instead of N*N.
    return pl.pallas_call(
        functools.partial(_attn_kernel, num_heads=num_heads,
                          head_dim=head_dim, scale=scale),
        grid=(B,),
        in_specs=[pl.BlockSpec((None, N, 3 * C), lambda b: (b, 0, 0))],
        out_specs=pl.BlockSpec((None, N, C), lambda b: (b, 0, 0)),
        out_shape=jax.ShapeDtypeStruct((B, N, C), qkv.dtype),
        compiler_params=pltpu.CompilerParams(
            dimension_semantics=("parallel",),
            vmem_limit_bytes=vmem_limit,
        ),
        cost_estimate=cost,
    )(qkv)


# ------------------------------- module forward ------------------------------

def prepare_params(torch_params):
    """One-time conversion from PyTorch nn.Linear layout ([out, in]) to the
    [in, out] layout the kernels consume (avoids per-forward transposes)."""
    return {
        "qkv_w": jnp.asarray(torch_params["qkv_w"]).T,    # [C, 3C]
        "qkv_b": (None if torch_params.get("qkv_b") is None
                  else jnp.asarray(torch_params["qkv_b"])),
        "proj_w": jnp.asarray(torch_params["proj_w"]).T,  # [C, C]
        "proj_b": jnp.asarray(torch_params["proj_b"]),
    }


def attention_forward(x, params, *, num_heads=8, qk_scale=None):
    """Pallas implementation of VOLO Attention.forward.

    x: [B, H, W, C]; params from prepare_params ([in, out] weight layout).
    """
    B, H, W, C = x.shape
    N = H * W
    hd = C // num_heads
    scale = qk_scale if qk_scale is not None else hd ** (-0.5)

    x2 = x.reshape(B * N, C)

    # --- fused QKV projection ------------------------------------------------
    qkv_b = params.get("qkv_b")
    if qkv_b is None:                                  # qkv_bias=False default
        qkv_b = jnp.zeros((3 * C,), x.dtype)
    qkv = _linear(x2, params["qkv_w"], qkv_b)          # [B*N, 3C]
    qkv = qkv.reshape(B, N, 3 * C)                     # leading-dim reshape only

    # --- fused attention (heads split/merged in-kernel, no XLA transposes) ---
    o = _attention_core(qkv, num_heads, hd, scale)     # [B, N, C]
    o = o.reshape(B * N, C)

    # --- output projection (proj_drop identity at p=0.0) ---------------------
    out = _linear(o, params["proj_w"], params["proj_b"])
    return out.reshape(B, H, W, C)


# ----------------------------- pure-JAX reference ----------------------------

def attention_reference(x, torch_params, *, num_heads=8, qk_scale=None):
    B, H, W, C = x.shape
    N = H * W
    hd = C // num_heads
    scale = qk_scale if qk_scale is not None else hd ** (-0.5)
    hp = lax.Precision.HIGHEST

    qkv = jnp.einsum("bnc,oc->bno", x.reshape(B, N, C), torch_params["qkv_w"],
                     precision=hp)
    if torch_params.get("qkv_b") is not None:
        qkv = qkv + torch_params["qkv_b"]
    qkv = qkv.reshape(B, N, 3, num_heads, hd).transpose(2, 0, 3, 1, 4)
    q, k, v = qkv[0], qkv[1], qkv[2]

    attn = jnp.einsum("bhqd,bhkd->bhqk", q, k, precision=hp) * scale
    attn = jax.nn.softmax(attn, axis=-1)
    o = jnp.einsum("bhqk,bhkd->bhqd", attn, v, precision=hp)
    o = o.transpose(0, 2, 1, 3).reshape(B, H, W, C)
    out = jnp.einsum("bhwc,oc->bhwo", o, torch_params["proj_w"], precision=hp)
    return out + torch_params["proj_b"]


# ----------------------------------- main ------------------------------------

if __name__ == "__main__":
    # Small shapes consistent with the module: dim=32, num_heads=8
    # (head_dim=4), input (B, H, W, C) = (2, 8, 8, 32) -> 64 tokens / image.
    B, HS, WS, C, HEADS = 2, 8, 8, 32, 8

    key = jax.random.PRNGKey(0)
    k0, k1, k2, k3 = jax.random.split(key, 4)
    torch_params = {
        # PyTorch nn.Linear convention: weight is [out_features, in_features].
        "qkv_w": 0.1 * jax.random.normal(k0, (3 * C, C), jnp.float32),
        "qkv_b": None,                      # qkv_bias=False (module default)
        "proj_w": 0.1 * jax.random.normal(k1, (C, C), jnp.float32),
        "proj_b": 0.05 * jax.random.normal(k2, (C,), jnp.float32),
    }
    params = prepare_params(torch_params)   # one-time layout conversion
    x = jax.random.normal(k3, (B, HS, WS, C), jnp.float32)

    out = jax.block_until_ready(attention_forward(x, params, num_heads=HEADS))
    ref = jax.block_until_ready(
        attention_reference(x, torch_params, num_heads=HEADS))

    assert out.shape == (B, HS, WS, C), out.shape
    np.testing.assert_allclose(np.asarray(out), np.asarray(ref),
                               rtol=1e-4, atol=1e-4)
    print("KERNEL_OK")
</pallas_src>

<mosaic_0001>
module attributes {stable_mosaic.version = 11 : i64} {
  func.func @_linear_kernel(%arg0: i32, %arg1: memref<128x32xf32, #tpu.memory_space<vmem>>, %arg2: memref<32x128xf32, #tpu.memory_space<vmem>>, %arg3: memref<1x128xf32, #tpu.memory_space<vmem>>, %arg4: memref<128x128xf32, #tpu.memory_space<vmem>>) attributes {dimension_semantics = [#tpu.dimension_semantics<parallel>], iteration_bounds = array<i64: 1>, scalar_prefetch = 0 : i64, scratch_operands = 0 : i64, tpu.core_type = #tpu.core_type<tc>, window_params = [{transform_indices = @transform_0, window_bounds = array<i64: 128, 32>}, {pipeline_mode = #tpu.pipeline_mode<synchronous>, transform_indices = @transform_1, window_bounds = array<i64: 32, 128>}, {pipeline_mode = #tpu.pipeline_mode<synchronous>, transform_indices = @transform_2, window_bounds = array<i64: 1, 128>}, {transform_indices = @transform_3, window_bounds = array<i64: 128, 128>}]} {
    %c0 = arith.constant 0 : index
    %c0_0 = arith.constant 0 : index
    %0 = vector.load %arg1[%c0, %c0_0] : memref<128x32xf32, #tpu.memory_space<vmem>>, vector<128x32xf32>
    %c0_1 = arith.constant 0 : index
    %c0_2 = arith.constant 0 : index
    %1 = vector.load %arg2[%c0_1, %c0_2] : memref<32x128xf32, #tpu.memory_space<vmem>>, vector<32x128xf32>
    %cst = arith.constant dense<0.000000e+00> : vector<128x128xf32>
    %2 = tpu.matmul %0, %1, %cst {dimension_numbers = #tpu.dot_dimension_numbers<[1], [0], [0], [1], [0, 0, 1, 1], [], []>} : vector<128x32xf32>, vector<32x128xf32>, vector<128x128xf32> -> vector<128x128xf32>
    %c0_3 = arith.constant 0 : index
    %c0_4 = arith.constant 0 : index
    %3 = vector.load %arg3[%c0_3, %c0_4] : memref<1x128xf32, #tpu.memory_space<vmem>>, vector<1x128xf32>
    %4 = vector.broadcast %3 : vector<1x128xf32> to vector<128x128xf32>
    %5 = arith.addf %2, %4 : vector<128x128xf32>
    %c0_5 = arith.constant 0 : index
    %c0_6 = arith.constant 0 : index
    %6 = vector.load %arg4[%c0_5, %c0_6] : memref<128x128xf32, #tpu.memory_space<vmem>>, vector<128x128xf32>
    tpu.vector_store %arg4[%c0_5, %c0_6], %5 {strides = array<i32>} : memref<128x128xf32, #tpu.memory_space<vmem>>, vector<128x128xf32>,
    return
  }
  func.func @transform_0(%arg0: i32) -> (i32, i32) {
    %c0_i32 = arith.constant 0 : i32
    %c0_i32_0 = arith.constant 0 : i32
    return %arg0, %c0_i32 : i32, i32
  }
  func.func @transform_1(%arg0: i32) -> (i32, i32) {
    %c0_i32 = arith.constant 0 : i32
    %c0_i32_0 = arith.constant 0 : i32
    %c0_i32_1 = arith.constant 0 : i32
    return %c0_i32, %c0_i32_0 : i32, i32
  }
  func.func @transform_2(%arg0: i32) -> (i32, i32) {
    %c0_i32 = arith.constant 0 : i32
    %c0_i32_0 = arith.constant 0 : i32
    %c0_i32_1 = arith.constant 0 : i32
    return %c0_i32, %c0_i32_0 : i32, i32
  }
  func.func @transform_3(%arg0: i32) -> (i32, i32) {
    %c0_i32 = arith.constant 0 : i32
    %c0_i32_0 = arith.constant 0 : i32
    return %arg0, %c0_i32 : i32, i32
  }
}

</mosaic_0001>

<llo_original>
// kernel: tpu_custom_call.1
$region0: #{tpu_custom_call.1}
  #allocation0 [shape = 'u32[]', space=smem, size = 0x4, offset = 0x4, fixed_abs, tag = 'smem constant byte address 0x4 - core index']
  #allocation1 [shape = 'u32[144,128]{1,0:T(1,128)}', space=vmem, size = 0x12000, scoped, tag = 'internal scratch']
  %s0 = inlined_call_operand.vmem [shape: f32[128,32], index: 0, kind: input, shape index: {}]
  %s1 = inlined_call_operand.vmem [shape: f32[32,128], index: 1, kind: input, shape index: {}]
  %s2 = inlined_call_operand.vmem [shape: f32[1,128], index: 2, kind: input, shape index: {}]
  %s3 = inlined_call_operand.hbm [shape: f32[128,128], index: 3, kind: output, shape index: {}]
  %s4 = sld [smem:[#allocation0]]
  $region22: #{tpu_custom_call.1} parent=0
    _
  %s6 = ssub.s32 1, %s4
  %s7 = scalar_select 0, %s6, %s4
  $region1: #{tpu_custom_call.1} parent=0
    #allocation2 [shape = 'u8[65536]{0}', space=vmem, size = 0x10000, scoped, tag = 'output window, operand 0, single buffered']
    #allocation3 [shape = 's32[1]{0}', space=sflag, size = 0x4, scoped, tag = 'scoped memory for tpu_custom_call.1']
    %8 = vsyncpa [#allocation3], 0
    // Predicated region
    $region2: #{tpu_custom_call.1} parent=1 // pred_check
      _
    $region3: #{tpu_custom_call.1} parent=1 // pred_check_branch
      %10 = sbr.rel (0) target = $region5
    $region4: #{tpu_custom_call.1} parent=1 // pred_region
      _
    $region5: #{tpu_custom_call.1} parent=1 // pred_fallthru
      _
    // Predicated region
    $region6: #{tpu_custom_call.1} parent=1 // pred_check
      _
    $region7: #{tpu_custom_call.1} parent=1 // pred_check_branch
      %12 = sbr.rel (0) target = $region9
    $region8: #{tpu_custom_call.1} parent=1 // pred_region
      _
    $region9: #{tpu_custom_call.1} parent=1 // pred_fallthru
      _
    // Predicated region
    $region10: #{tpu_custom_call.1} parent=1 // pred_check
      _
    $region11: #{tpu_custom_call.1} parent=1 // pred_check_branch
      %14 = sbr.rel (0) target = $region13
    $region12: #{tpu_custom_call.1} parent=1 // pred_region
      _
    $region13: #{tpu_custom_call.1} parent=1 // pred_fallthru
      _
    %v15 = vld [vmem:[%s0] sm:$0xff]
    %v16 = vld [vmem:[%s0 + $0x8] sm:$0xff]
    %v17 = vld [vmem:[%s0 + $0x10] sm:$0xff]
    %v18 = vld [vmem:[%s0 + $0x18] sm:$0xff]
    %v19 = vld [vmem:[%s0 + $0x20] sm:$0xff]
    %v20 = vld [vmem:[%s0 + $0x28] sm:$0xff]
    %v21 = vld [vmem:[%s0 + $0x30] sm:$0xff]
    %v22 = vld [vmem:[%s0 + $0x38] sm:$0xff]
    %v23 = vld [vmem:[%s0 + $0x40] sm:$0xff]
    %v24 = vld [vmem:[%s0 + $0x48] sm:$0xff]
    %v25 = vld [vmem:[%s0 + $0x50] sm:$0xff]
    %v26 = vld [vmem:[%s0 + $0x58] sm:$0xff]
    %v27 = vld [vmem:[%s0 + $0x60] sm:$0xff]
    %v28 = vld [vmem:[%s0 + $0x68] sm:$0xff]
    %v29 = vld [vmem:[%s0 + $0x70] sm:$0xff]
    %v30 = vld [vmem:[%s0 + $0x78] sm:$0xff]
    %v31 = vld [vmem:[%s1] sm:$0xff]
    %v32 = vld [vmem:[%s1 + $0x8] sm:$0xff]
    %v33 = vld [vmem:[%s1 + $0x10] sm:$0xff]
    %v34 = vld [vmem:[%s1 + $0x18] sm:$0xff]
    %v35 = vld [vmem:[%s2] sm:$0x1]
    %v37 = vlaneseq
    %v38 = vshrl.u32 %v37, 7
    %v39 = vsub.s32 0, %v38
    %v40 = vrot.slane %v35, %v39
    %vm42 = vcmask 261120
    %v44 = vsel %vm42, %v15, 0
    %v47 = vsel %vm42, %v16, 0
    %v50 = vsel %vm42, %v17, 0
    %v53 = vsel %vm42, %v18, 0
    %v56 = vsel %vm42, %v19, 0
    %v59 = vsel %vm42, %v20, 0
    %v62 = vsel %vm42, %v21, 0
    %v65 = vsel %vm42, %v22, 0
    %v68 = vsel %vm42, %v23, 0
    %v71 = vsel %vm42, %v24, 0
    %v74 = vsel %vm42, %v25, 0
    %v77 = vsel %vm42, %v26, 0
    %v80 = vsel %vm42, %v27, 0
    %v83 = vsel %vm42, %v28, 0
    %v86 = vsel %vm42, %v29, 0
    %v89 = vsel %vm42, %v30, 0
    %91 = vmatprep.subr.mxu0 0.0
    %92 = vmatpush1.msra.mxu0 0.0
    %93 = vmatprep.subr.mxu0 0.0
    %94 = vmatpush1.msra.mxu0 0.0
    %95 = vmatprep.subr.mxu0 0.0
    %96 = vmatpush1.msra.mxu0 0.0
    %97 = vmatprep.subr.mxu0 0.0
    %98 = vmatpush1.msra.mxu0 0.0
    %99 = vmatprep.subr.mxu0 0.0
    %100 = vmatpush1.msra.mxu0 0.0
    %101 = vmatprep.subr.mxu0 0.0
    %102 = vmatpush1.msra.mxu0 0.0
    %103 = vmatprep.subr.mxu0 0.0
    %104 = vmatpush1.msra.mxu0 0.0
    %105 = vmatprep.subr.mxu0 0.0
    %106 = vmatpush1.msra.mxu0 0.0
    %107 = vmatprep.subr.mxu0 0.0
    %108 = vmatpush1.msra.mxu0 0.0
    %109 = vmatprep.subr.mxu0 0.0
    %110 = vmatpush1.msra.mxu0 0.0
    %111 = vmatprep.subr.mxu0 0.0
    %112 = vmatpush1.msra.mxu0 0.0
    %113 = vmatprep.subr.mxu0 0.0
    %114 = vmatpush1.msra.mxu0 0.0
    %115 = vmatprep.subr.mxu0 0.0
    %116 = vmatpush1.msra.mxu0 %v34
    %117 = vmatprep.subr.mxu0 0.0
    %118 = vmatpush1.msra.mxu0 %v33
    %119 = vmatprep.subr.mxu0 0.0
    %120 = vmatpush1.msra.mxu0 %v32
    %121 = vmatprep.subr.mxu0 0.0
    %122 = vmatpush1.msra.mxu0 %v31
    %123 = vmatprep.subr.mxu0 0.0
    %124 = vmatpush2.msra.mxu0 0.0
    %125 = vmatprep.subr.mxu0 0.0
    %126 = vmatpush2.msra.mxu0 0.0
    %127 = vmatprep.subr.mxu0 0.0
    %128 = vmatpush2.msra.mxu0 0.0
    %129 = vmatprep.subr.mxu0 0.0
    %130 = vmatpush2.msra.mxu0 0.0
    %131 = vmatprep.subr.mxu0 0.0
    %132 = vmatpush2.msra.mxu0 0.0
    %133 = vmatprep.subr.mxu0 0.0
    %134 = vmatpush2.msra.mxu0 0.0
    %135 = vmatprep.subr.mxu0 0.0
    %136 = vmatpush2.msra.mxu0 0.0
    %137 = vmatprep.subr.mxu0 0.0
    %138 = vmatpush2.msra.mxu0 0.0
    %139 = vmatprep.subr.mxu0 0.0
    %140 = vmatpush2.msra.mxu0 0.0
    %141 = vmatprep.subr.mxu0 0.0
    %142 = vmatpush2.msra.mxu0 0.0
    %143 = vmatprep.subr.mxu0 0.0
    %144 = vmatpush2.msra.mxu0 0.0
    %145 = vmatprep.subr.mxu0 0.0
    %146 = vmatpush2.msra.mxu0 0.0
    %147 = vmatprep.subr.mxu0 0.0
    %148 = vmatpush2.msra.mxu0 0.0
    %149 = vmatprep.subr.mxu0 0.0
    %150 = vmatpush2.msra.mxu0 0.0
    %151 = vmatprep.subr.mxu0 0.0
    %152 = vmatpush2.msra.mxu0 0.0
    %153 = vmatprep.subr.mxu0 0.0
    %154 = vmatpush2.msra.mxu0 0.0
    %155 = vmatprep.mubr.f32.mxu0 0.0
    %156 = vmatmul.mubr.f32.gmra.mxu0 %v44
    %v157 = vpop.f32.mrf.mxu0
    %v158 = vadd.f32 %v40, %v157
    %v159 = vpop.f32.mrf.mxu0
    %160 = vmatprep.mubr.f32.mxu0 0.0
    %161 = vmatmul.mubr.f32.gmra.mxu0 %v47
    %v162 = vpop.f32.mrf.mxu0
    %v163 = vadd.f32 %v40, %v162
    %v164 = vpop.f32.mrf.mxu0
    %165 = vmatprep.mubr.f32.mxu0 0.0
    %166 = vmatmul.mubr.f32.gmra.mxu0 %v50
    %v167 = vpop.f32.mrf.mxu0
    %v168 = vadd.f32 %v40, %v167
    %v169 = vpop.f32.mrf.mxu0
    %170 = vmatprep.mubr.f32.mxu0 0.0
    %171 = vmatmul.mubr.f32.gmra.mxu0 %v53
    %v172 = vpop.f32.mrf.mxu0
    %v173 = vadd.f32 %v40, %v172
    %v174 = vpop.f32.mrf.mxu0
    %175 = vmatprep.mubr.f32.mxu0 0.0
    %176 = vmatmul.mubr.f32.gmra.mxu0 %v56
    %v177 = vpop.f32.mrf.mxu0
    %v178 = vadd.f32 %v40, %v177
    %v179 = vpop.f32.mrf.mxu0
    %180 = vmatprep.mubr.f32.mxu0 0.0
    %181 = vmatmul.mubr.f32.gmra.mxu0 %v59
    %v182 = vpop.f32.mrf.mxu0
    %v183 = vadd.f32 %v40, %v182
    %v184 = vpop.f32.mrf.mxu0
    %185 = vmatprep.mubr.f32.mxu0 0.0
    %186 = vmatmul.mubr.f32.gmra.mxu0 %v62
    %v187 = vpop.f32.mrf.mxu0
    %v188 = vadd.f32 %v40, %v187
    %v189 = vpop.f32.mrf.mxu0
    %190 = vmatprep.mubr.f32.mxu0 0.0
    %191 = vmatmul.mubr.f32.gmra.mxu0 %v65
    %v192 = vpop.f32.mrf.mxu0
    %v193 = vadd.f32 %v40, %v192
    %v194 = vpop.f32.mrf.mxu0
    %195 = vmatprep.mubr.f32.mxu0 0.0
    %196 = vmatmul.mubr.f32.gmra.mxu0 %v68
    %v197 = vpop.f32.mrf.mxu0
    %v198 = vadd.f32 %v40, %v197
    %v199 = vpop.f32.mrf.mxu0
    %200 = vmatprep.mubr.f32.mxu0 0.0
    %201 = vmatmul.mubr.f32.gmra.mxu0 %v71
    %v202 = vpop.f32.mrf.mxu0
    %v203 = vadd.f32 %v40, %v202
    %v204 = vpop.f32.mrf.mxu0
    %205 = vmatprep.mubr.f32.mxu0 0.0
    %206 = vmatmul.mubr.f32.gmra.mxu0 %v74
    %v207 = vpop.f32.mrf.mxu0
    %v208 = vadd.f32 %v40, %v207
    %v209 = vpop.f32.mrf.mxu0
    %210 = vmatprep.mubr.f32.mxu0 0.0
    %211 = vmatmul.mubr.f32.gmra.mxu0 %v77
    %v212 = vpop.f32.mrf.mxu0
    %v213 = vadd.f32 %v40, %v212
    %v214 = vpop.f32.mrf.mxu0
    %215 = vmatprep.mubr.f32.mxu0 0.0
    %216 = vmatmul.mubr.f32.gmra.mxu0 %v80
    %v217 = vpop.f32.mrf.mxu0
    %v218 = vadd.f32 %v40, %v217
    %v219 = vpop.f32.mrf.mxu0
    %220 = vmatprep.mubr.f32.mxu0 0.0
    %221 = vmatmul.mubr.f32.gmra.mxu0 %v83
    %v222 = vpop.f32.mrf.mxu0
    %v223 = vadd.f32 %v40, %v222
    %v224 = vpop.f32.mrf.mxu0
    %225 = vmatprep.mubr.f32.mxu0 0.0
    %226 = vmatmul.mubr.f32.gmra.mxu0 %v86
    %v227 = vpop.f32.mrf.mxu0
    %v228 = vadd.f32 %v40, %v227
    %v229 = vpop.f32.mrf.mxu0
    %230 = vmatprep.mubr.f32.mxu0 0.0
    %231 = vmatmul.mubr.f32.gmra.mxu0 %v89
    %v232 = vpop.f32.mrf.mxu0
    %v233 = vadd.f32 %v40, %v232
    %v234 = vpop.f32.mrf.mxu0
    %235 = vdwg.mxu0
    %236 = vst [vmem:[#allocation2] sm:$0xff] %v158
    %237 = vst [vmem:[#allocation2 + $0x8] sm:$0xff] %v163
    %238 = vst [vmem:[#allocation2 + $0x10] sm:$0xff] %v168
    %239 = vst [vmem:[#allocation2 + $0x18] sm:$0xff] %v173
    %240 = vst [vmem:[#allocation2 + $0x20] sm:$0xff] %v178
    %241 = vst [vmem:[#allocation2 + $0x28] sm:$0xff] %v183
    %242 = vst [vmem:[#allocation2 + $0x30] sm:$0xff] %v188
    %243 = vst [vmem:[#allocation2 + $0x38] sm:$0xff] %v193
    %244 = vst [vmem:[#allocation2 + $0x40] sm:$0xff] %v198
    %245 = vst [vmem:[#allocation2 + $0x48] sm:$0xff] %v203
    %246 = vst [vmem:[#allocation2 + $0x50] sm:$0xff] %v208
    %247 = vst [vmem:[#allocation2 + $0x58] sm:$0xff] %v213
    %248 = vst [vmem:[#allocation2 + $0x60] sm:$0xff] %v218
    %249 = vst [vmem:[#allocation2 + $0x68] sm:$0xff] %v223
    %250 = vst [vmem:[#allocation2 + $0x70] sm:$0xff] %v228
    %251 = vst [vmem:[#allocation2 + $0x78] sm:$0xff] %v233
    // Predicated region
    $region14: #{tpu_custom_call.1} parent=1 // pred_check
      _
    $region15: #{tpu_custom_call.1} parent=1 // pred_check_branch
      %253 = sbr.rel (0) target = $region17
    $region16: #{tpu_custom_call.1} parent=1 // pred_region
      %s255 = ssub.s32 2048, 2048
      %256 = vsyncadd [#allocation3], %s255
      %s257 = sshll.u32 [#allocation2], 4
      %s258 = int_to_ptr.vmem [resolvable:$true] %s257
      %263 = dma.vmem_to_hbm [thread:$0]  %s258, 2048, %s3, [#allocation3], 128, 128, 8
    $region17: #{tpu_custom_call.1} parent=1 // pred_fallthru
      _
    // Predicated region
    $region18: #{tpu_custom_call.1} parent=1 // pred_check
      _
    $region19: #{tpu_custom_call.1} parent=1 // pred_check_branch
      %265 = sbr.rel (0) target = $region21
    $region20: #{tpu_custom_call.1} parent=1 // pred_region
      %266 = dma.done [#allocation3], 2048
    $region21: #{tpu_custom_call.1} parent=1 // pred_fallthru
      _
    %267 = vsyncpa [#allocation3], 1

</llo_original>
